<compile_context>
chip_gen: v6e
topology: v6e:2x2x1
jax: 0.10.0
libtpu: 0.0.40
codegen_flags: <defaults>
</compile_context>

<pallas_src>
import functools

import jax
import jax.numpy as jnp
from jax.experimental import pallas as pl
from jax.experimental.pallas import tpu as pltpu


def _round_up(v, m):
    return (v + m - 1) // m * m


def _cdiv(a, b):
    return -(-a // b)


# ---------------------------------------------------------------------------
# float16 round-trip emulation (fallback when Mosaic rejects f16 converts)
# ---------------------------------------------------------------------------
def _round_through_f16(p):
    """Value-level emulation of p.astype(float16).astype(float32).

    Uses only f32/int32 vector ops (bit-level RNE mantissa rounding, overflow
    clamp to +/-inf, subnormal quantization to multiples of 2**-24), which
    lower cleanly in Mosaic on every TPU generation.
    """
    bits = pltpu.bitcast(p, jnp.int32)
    lsb = (bits >> 13) & jnp.int32(1)                       # lowest kept bit
    rbits = (bits + jnp.int32(0x0FFF) + lsb) & jnp.int32(-8192)
    q = pltpu.bitcast(rbits, jnp.float32)
    inf = jnp.float32(jnp.inf)
    q = jnp.where(jnp.abs(q) > jnp.float32(65504.0),
                  jnp.where(q > 0, inf, -inf), q)
    magic = jnp.float32(1.5 * 2.0 ** 23)
    tiny = ((p * jnp.float32(2.0 ** 24) + magic) - magic) * jnp.float32(2.0 ** -24)
    return jnp.where(jnp.abs(p) < jnp.float32(2.0 ** -14), tiny, q)


# ---------------------------------------------------------------------------
# Kernel
# ---------------------------------------------------------------------------
def _lora_group_kernel(x_ref, wd_ref, wu_ref, o_ref, *, groups, inv_g,
                       native_f16):
    # Stage 1 (hoisted out of the group loop): ONE MXU pass over the x tile
    # produces every group's low-rank activation.  h: (TM, R) in f32.
    h = jnp.dot(x_ref[...], wd_ref[...], preferred_element_type=jnp.float32)
    h_lo = h.astype(wd_ref.dtype)          # cast ONCE for the up-projection

    # Stage 2: per-group up-projection against the band-packed (R, O_pad)
    # weight slabs (zero rows outside group g's band) -> no cross-lane slice
    # of h, no per-group casts.
    prod = None
    for g in range(groups):
        # TODO(synk): nn.Dropout is identity in eval mode; training-mode
        # stochastic dropout is not implemented here.
        y = jnp.dot(h_lo, wu_ref[g], preferred_element_type=jnp.float32)
        if native_f16:
            # torch.prod(..., dtype=float16): cast each factor to f16 and
            # accumulate the product with f16 rounding at every step.
            y = y.astype(jnp.float16).astype(jnp.float32)
            prod = y if prod is None else (
                (prod * y).astype(jnp.float16).astype(jnp.float32))
        else:
            prod = y if prod is None else prod * y

    if not native_f16:
        # Fallback: accumulate in f32 and round through f16 once at the end
        # (within ~1 f16 ulp of torch's per-step accumulation for small G).
        prod = _round_through_f16(prod)

    # torch: prod_f16 ** (1/groups), promoted to f32.  Power-of-two group
    # counts avoid exp/log on the EUP.
    if groups == 1:
        res = prod
    elif groups == 2:
        res = jnp.sqrt(prod)
    elif groups == 4:
        res = jnp.sqrt(jnp.sqrt(prod))
    else:
        res = jnp.exp(jnp.log(prod) * jnp.float32(inv_g))
    o_ref[...] = res.astype(o_ref.dtype)


# ---------------------------------------------------------------------------
# Generation-aware tiling
# ---------------------------------------------------------------------------
def _tpu_hints():
    """(vmem_capacity_bytes, row_multiple, num_tensorcores) for this device."""
    vmem_cap = 64 * 1024 * 1024            # conservative default (v7x per-TC)
    try:
        vmem_cap = int(pltpu.get_tpu_info().vmem_capacity_bytes)
    except Exception:
        pass
    kind = ""
    try:
        kind = jax.devices()[0].device_kind.lower()
    except Exception:
        pass
    is_v5e = ("v5 lite" in kind) or ("v5e" in kind) or ("v5litepod" in kind)
    # v5e's MXU is 4x128x128 -> 128-row granularity already fills it;
    # v6e / v7x MXUs are 256 wide.
    rowmult = 128 if is_v5e else 256
    # v7x: 64 MiB per-TC VMEM and 2 TensorCores per chip; make sure the single
    # "parallel" grid axis gets >= 2 steps there so both TCs have work.
    num_tc = 2 if vmem_cap <= 80 * 1024 * 1024 else 1
    return vmem_cap, rowmult, num_tc


def _choose_tm(M, C, R, O_pad, G, cd_bytes, out_bytes, budget, rowmult, num_tc,
               weight_bufs):
    """Largest M-tile whose working set fits the per-generation VMEM budget."""
    per_row = (2 * C * cd_bytes            # x tile (double-buffered)
               + 2 * O_pad * out_bytes     # out tile (double-buffered)
               + R * (4 + cd_bytes)        # h (f32) + h_lo (compute dtype)
               + 3 * O_pad * 4)            # y / prod / epilogue temporaries
    fixed = weight_bufs * (C * R + G * R * O_pad) * cd_bytes
    tm = (budget - fixed) // max(per_row, 1)
    tm = int(max(8, min(tm, 2048)))
    if num_tc > 1 and M >= 2 * rowmult:
        # Cap so the parallel grid spans both TensorCores (v7x).
        tm = min(tm, _round_up(_cdiv(M, num_tc), rowmult))
    if tm >= M:
        return M                           # single full-extent block: always legal
    if tm >= rowmult:
        tm = (tm // rowmult) * rowmult
    else:
        tm = max(8, (tm // 8) * 8)
    return tm


# ---------------------------------------------------------------------------
# Wrapper
# ---------------------------------------------------------------------------
def _forward(x, w_down, w_up, rank_groups, *, native_f16, single_buffer_weights,
             compute_dtype, out_dtype, tm):
    B, L, C = x.shape
    G, C2, Ri = w_down.shape
    O = w_up.shape[-1]
    assert G == rank_groups and C2 == C and w_up.shape[:2] == (G, Ri)
    R = G * Ri
    M = B * L

    cd = jnp.dtype(compute_dtype if compute_dtype is not None else x.dtype)
    cd_bytes = cd.itemsize
    out_bytes = jnp.dtype(out_dtype).itemsize

    # Lane-dense output stores: pad the out dim up to a multiple of 128
    # (no-op when out_features is already aligned).
    O_pad = _round_up(O, 128)

    # W_down packed as (C, R): group g occupies columns [g*Ri, (g+1)*Ri).
    wd_packed = jnp.transpose(w_down, (1, 0, 2)).reshape(C, R).astype(cd)

    # W_up band-packed as (G, R, O_pad): group g's weights sit in rows
    # [g*Ri, (g+1)*Ri), every other row is zero -> the per-group up-projection
    # runs over the full K=R without slicing h (no cross-lane shuffles).
    wu_full = w_up.reshape(R, O)
    band = (jnp.repeat(jnp.arange(G), Ri)[None, :] == jnp.arange(G)[:, None])
    wu_banded = jnp.where(band[:, :, None], wu_full[None, :, :], 0)
    if O_pad != O:
        wu_banded = jnp.pad(wu_banded, ((0, 0), (0, 0), (0, O_pad - O)))
    wu_banded = wu_banded.astype(cd)

    # No M padding / no [:M] slice: Pallas clips the partial last block.
    x2d = x.reshape(M, C).astype(cd)

    vmem_cap, rowmult, num_tc = _tpu_hints()
    weight_bufs = 1 if single_buffer_weights else 2
    if tm is None:
        TM = _choose_tm(M, C, R, O_pad, G, cd_bytes, out_bytes,
                        budget=vmem_cap // 2, rowmult=rowmult, num_tc=num_tc,
                        weight_bufs=weight_bufs)
    else:
        TM = int(tm)
        TM = M if TM >= M else max(8, (TM // 8) * 8)
    n_m = _cdiv(M, TM)

    def _wspec(shape, index_map):
        if single_buffer_weights:
            # Constant index map -> fetched once; skip the second buffer.
            return pl.BlockSpec(shape, index_map, pipeline_mode=pl.Buffered(1))
        return pl.BlockSpec(shape, index_map)

    kernel = functools.partial(_lora_group_kernel, groups=G, inv_g=1.0 / G,
                               native_f16=native_f16)

    cost = pl.CostEstimate(
        flops=int(2 * M * C * R + 2 * M * R * O_pad * G + 4 * M * O_pad),
        transcendentals=int(0 if G == 1 else
                            (M * O_pad if G in (2, 4) else 2 * M * O_pad)),
        bytes_accessed=int(M * C * cd_bytes
                           + (C * R + G * R * O_pad) * cd_bytes
                           + M * O_pad * out_bytes),
    )

    out = pl.pallas_call(
        kernel,
        out_shape=jax.ShapeDtypeStruct((M, O_pad), out_dtype),
        grid_spec=pltpu.PrefetchScalarGridSpec(
            num_scalar_prefetch=0,
            grid=(n_m,),
            in_specs=[
                pl.BlockSpec((TM, C), lambda m: (m, 0)),        # x tile
                _wspec((C, R), lambda m: (0, 0)),               # packed W_down
                _wspec((G, R, O_pad), lambda m: (0, 0, 0)),     # banded W_up
            ],
            out_specs=pl.BlockSpec((TM, O_pad), lambda m: (m, 0)),
        ),
        compiler_params=pltpu.CompilerParams(
            dimension_semantics=("parallel",),
            vmem_limit_bytes=int(vmem_cap * 0.6),
        ),
        cost_estimate=cost,
    )(x2d, wd_packed, wu_banded)

    out = out if O_pad == O else out[:, :O]
    return out.reshape(B, L, O)


_CFG_CHAIN = (
    # fastest: native f16 casts + single-buffered (constant-index) weights
    dict(native_f16=True, single_buffer_weights=True),
    # if pl.Buffered(1) is rejected on this jax / TPU combination
    dict(native_f16=True, single_buffer_weights=False),
    # if Mosaic rejects f16 converts on this generation (proven-safe path)
    dict(native_f16=False, single_buffer_weights=False),
)
_cfg_start = 0   # cached index of the first config that lowered successfully


def lora_linear_group_forward(x, w_down, w_up, rank_groups, *,
                              compute_dtype=None, out_dtype=jnp.float32,
                              tm=None):
    """x: (B, L, C); w_down: (G, C, R//G); w_up: (G, R//G, O) -> (B, L, O)."""
    global _cfg_start
    last_err = None
    for i in range(_cfg_start, len(_CFG_CHAIN)):
        try:
            out = _forward(x, w_down, w_up, rank_groups,
                           compute_dtype=compute_dtype, out_dtype=out_dtype,
                           tm=tm, **_CFG_CHAIN[i])
            jax.block_until_ready(out)
            _cfg_start = i
            return out
        except Exception as err:      # Mosaic rejected this lowering variant
            last_err = err
    raise last_err


# ---------------------------------------------------------------------------
# Pure-JAX reference (torch-faithful f16 product accumulation)
# ---------------------------------------------------------------------------
def _reference(x, w_down, w_up, rank_groups):
    h = jnp.einsum('blc,gcr->bglr', x.astype(jnp.float32),
                   w_down.astype(jnp.float32))
    y = jnp.einsum('bglr,gro->bglo', h, w_up.astype(jnp.float32))
    p = y[:, 0].astype(jnp.float16)
    for g in range(1, rank_groups):
        p = (p.astype(jnp.float32)
             * y[:, g].astype(jnp.float16).astype(jnp.float32)
             ).astype(jnp.float16)
    return jnp.power(p.astype(jnp.float32), jnp.float32(1.0 / rank_groups))


if __name__ == "__main__":
    key = jax.random.PRNGKey(0)

    # Shapes consistent with the module: B=2, L=8, in=out=32, rank=8, groups=2.
    B, L = 2, 8
    in_features, out_features = 32, 32
    rank, rank_groups = 8, 2
    ri = rank // rank_groups

    k1, k2, k3, k4 = jax.random.split(key, 4)
    # Positive deterministic init keeps the fractional power real-valued.
    x = jax.random.uniform(k1, (B, L, in_features), jnp.float32, 0.1, 1.0)
    w_down = jax.random.uniform(k2, (rank_groups, in_features, ri),
                                jnp.float32, 0.01, 0.1)
    w_up = jax.random.uniform(k3, (rank_groups, ri, out_features),
                              jnp.float32, 0.01, 0.1)

    y = lora_linear_group_forward(x, w_down, w_up, rank_groups)
    jax.block_until_ready(y)
    y_ref = _reference(x, w_down, w_up, rank_groups)
    assert y.shape == (B, L, out_features)
    assert bool(jnp.all(jnp.isfinite(y))), "non-finite output"
    assert jnp.allclose(y, y_ref, rtol=5e-3, atol=1e-5), "mismatch vs reference"

    # Exercise the partial-last-block (M % TM != 0) and bf16-activation paths.
    B2, L2 = 2, 20                        # M = 40 rows, forced TM = 16 -> 3 steps
    x2 = jax.random.uniform(k4, (B2, L2, in_features),
                            jnp.float32, 0.1, 1.0).astype(jnp.bfloat16)
    y2 = lora_linear_group_forward(x2, w_down, w_up, rank_groups, tm=16)
    jax.block_until_ready(y2)
    y2_ref = _reference(x2.astype(jnp.float32), w_down, w_up, rank_groups)
    assert y2.shape == (B2, L2, out_features)
    assert bool(jnp.all(jnp.isfinite(y2))), "non-finite output (bf16 path)"
    assert jnp.allclose(y2, y2_ref, rtol=3e-2, atol=1e-3), "mismatch (bf16 path)"

    print("KERNEL_OK")
</pallas_src>

<mosaic_0001>
module attributes {stable_mosaic.version = 11 : i64} {
  func.func @_lora_group_kernel(%arg0: i32, %arg1: memref<16x32xf32, #tpu.memory_space<vmem>>, %arg2: memref<32x8xf32, #tpu.memory_space<vmem>>, %arg3: memref<2x8x128xf32, #tpu.memory_space<vmem>>, %arg4: memref<16x128xf32, #tpu.memory_space<vmem>>) attributes {dimension_semantics = [#tpu.dimension_semantics<parallel>], iteration_bounds = array<i64: 1>, scalar_prefetch = 0 : i64, scratch_operands = 0 : i64, tpu.core_type = #tpu.core_type<tc>, window_params = [{transform_indices = @transform_0, window_bounds = array<i64: 16, 32>}, {pipeline_mode = #tpu.pipeline_mode<synchronous>, transform_indices = @transform_1, window_bounds = array<i64: 32, 8>}, {pipeline_mode = #tpu.pipeline_mode<synchronous>, transform_indices = @transform_2, window_bounds = array<i64: 2, 8, 128>}, {transform_indices = @transform_3, window_bounds = array<i64: 16, 128>}]} {
    %c0 = arith.constant 0 : index
    %c0_0 = arith.constant 0 : index
    %0 = vector.load %arg1[%c0, %c0_0] : memref<16x32xf32, #tpu.memory_space<vmem>>, vector<16x32xf32>
    %c0_1 = arith.constant 0 : index
    %c0_2 = arith.constant 0 : index
    %1 = vector.load %arg2[%c0_1, %c0_2] : memref<32x8xf32, #tpu.memory_space<vmem>>, vector<32x8xf32>
    %cst = arith.constant dense<0.000000e+00> : vector<16x8xf32>
    %2 = tpu.matmul %0, %1, %cst {dimension_numbers = #tpu.dot_dimension_numbers<[1], [0], [0], [1], [0, 0, 1, 1], [], []>} : vector<16x32xf32>, vector<32x8xf32>, vector<16x8xf32> -> vector<16x8xf32>
    %c0_3 = arith.constant 0 : index
    %c0_4 = arith.constant 0 : index
    %c0_5 = arith.constant 0 : index
    %3 = vector.load %arg3[%c0_3, %c0_4, %c0_5] : memref<2x8x128xf32, #tpu.memory_space<vmem>>, vector<1x8x128xf32>
    %4 = vector.shape_cast %3 : vector<1x8x128xf32> to vector<8x128xf32>
    %cst_6 = arith.constant dense<0.000000e+00> : vector<16x128xf32>
    %5 = tpu.matmul %2, %4, %cst_6 {dimension_numbers = #tpu.dot_dimension_numbers<[1], [0], [0], [1], [0, 0, 1, 1], [], []>} : vector<16x8xf32>, vector<8x128xf32>, vector<16x128xf32> -> vector<16x128xf32>
    %6 = arith.truncf %5 : vector<16x128xf32> to vector<16x128xf16>
    %7 = arith.extf %6 : vector<16x128xf16> to vector<16x128xf32>
    %c1 = arith.constant 1 : index
    %c0_7 = arith.constant 0 : index
    %c0_8 = arith.constant 0 : index
    %8 = vector.load %arg3[%c1, %c0_7, %c0_8] : memref<2x8x128xf32, #tpu.memory_space<vmem>>, vector<1x8x128xf32>
    %9 = vector.shape_cast %8 : vector<1x8x128xf32> to vector<8x128xf32>
    %cst_9 = arith.constant dense<0.000000e+00> : vector<16x128xf32>
    %10 = tpu.matmul %2, %9, %cst_9 {dimension_numbers = #tpu.dot_dimension_numbers<[1], [0], [0], [1], [0, 0, 1, 1], [], []>} : vector<16x8xf32>, vector<8x128xf32>, vector<16x128xf32> -> vector<16x128xf32>
    %11 = arith.truncf %10 : vector<16x128xf32> to vector<16x128xf16>
    %12 = arith.extf %11 : vector<16x128xf16> to vector<16x128xf32>
    %13 = arith.mulf %7, %12 : vector<16x128xf32>
    %14 = arith.truncf %13 : vector<16x128xf32> to vector<16x128xf16>
    %15 = arith.extf %14 : vector<16x128xf16> to vector<16x128xf32>
    %16 = math.sqrt %15 : vector<16x128xf32>
    %c0_10 = arith.constant 0 : index
    %c0_11 = arith.constant 0 : index
    %17 = vector.load %arg4[%c0_10, %c0_11] : memref<16x128xf32, #tpu.memory_space<vmem>>, vector<16x128xf32>
    tpu.vector_store %arg4[%c0_10, %c0_11], %16 {strides = array<i32>} : memref<16x128xf32, #tpu.memory_space<vmem>>, vector<16x128xf32>,
    return
  }
  func.func @transform_0(%arg0: i32) -> (i32, i32) {
    %c0_i32 = arith.constant 0 : i32
    %c0_i32_0 = arith.constant 0 : i32
    return %arg0, %c0_i32 : i32, i32
  }
  func.func @transform_1(%arg0: i32) -> (i32, i32) {
    %c0_i32 = arith.constant 0 : i32
    %c0_i32_0 = arith.constant 0 : i32
    %c0_i32_1 = arith.constant 0 : i32
    return %c0_i32, %c0_i32_0 : i32, i32
  }
  func.func @transform_2(%arg0: i32) -> (i32, i32, i32) {
    %c0_i32 = arith.constant 0 : i32
    %c0_i32_0 = arith.constant 0 : i32
    %c0_i32_1 = arith.constant 0 : i32
    %c0_i32_2 = arith.constant 0 : i32
    return %c0_i32, %c0_i32_0, %c0_i32_1 : i32, i32, i32
  }
  func.func @transform_3(%arg0: i32) -> (i32, i32) {
    %c0_i32 = arith.constant 0 : i32
    %c0_i32_0 = arith.constant 0 : i32
    return %arg0, %c0_i32 : i32, i32
  }
}

module attributes {stable_mosaic.version = 11 : i64} {
  func.func @_lora_group_kernel(%arg0: i32, %arg1: memref<16x32xf32, #tpu.memory_space<vmem>>, %arg2: memref<32x8xf32, #tpu.memory_space<vmem>>, %arg3: memref<2x8x128xf32, #tpu.memory_space<vmem>>, %arg4: memref<16x128xf32, #tpu.memory_space<vmem>>) attributes {dimension_semantics = [#tpu.dimension_semantics<parallel>], iteration_bounds = array<i64: 1>, scalar_prefetch = 0 : i64, scratch_operands = 0 : i64, tpu.core_type = #tpu.core_type<tc>, window_params = [{transform_indices = @transform_0, window_bounds = array<i64: 16, 32>}, {pipeline_mode = #tpu.pipeline_mode<synchronous>, transform_indices = @transform_1, window_bounds = array<i64: 32, 8>}, {pipeline_mode = #tpu.pipeline_mode<synchronous>, transform_indices = @transform_2, window_bounds = array<i64: 2, 8, 128>}, {transform_indices = @transform_3, window_bounds = array<i64: 16, 128>}]} {
    %c0 = arith.constant 0 : index
    %c0_0 = arith.constant 0 : index
    %0 = vector.load %arg1[%c0, %c0_0] : memref<16x32xf32, #tpu.memory_space<vmem>>, vector<16x32xf32>
    %c0_1 = arith.constant 0 : index
    %c0_2 = arith.constant 0 : index
    %1 = vector.load %arg2[%c0_1, %c0_2] : memref<32x8xf32, #tpu.memory_space<vmem>>, vector<32x8xf32>
    %cst = arith.constant dense<0.000000e+00> : vector<16x8xf32>
    %2 = tpu.matmul %0, %1, %cst {dimension_numbers = #tpu.dot_dimension_numbers<[1], [0], [0], [1], [0, 0, 1, 1], [], []>} : vector<16x32xf32>, vector<32x8xf32>, vector<16x8xf32> -> vector<16x8xf32>
    %c0_3 = arith.constant 0 : index
    %c0_4 = arith.constant 0 : index
    %c0_5 = arith.constant 0 : index
    %3 = vector.load %arg3[%c0_3, %c0_4, %c0_5] : memref<2x8x128xf32, #tpu.memory_space<vmem>>, vector<1x8x128xf32>
    %4 = vector.shape_cast %3 : vector<1x8x128xf32> to vector<8x128xf32>
    %cst_6 = arith.constant dense<0.000000e+00> : vector<16x128xf32>
    %5 = tpu.matmul %2, %4, %cst_6 {dimension_numbers = #tpu.dot_dimension_numbers<[1], [0], [0], [1], [0, 0, 1, 1], [], []>} : vector<16x8xf32>, vector<8x128xf32>, vector<16x128xf32> -> vector<16x128xf32>
    %6 = arith.truncf %5 : vector<16x128xf32> to vector<16x128xf16>
    %7 = arith.extf %6 : vector<16x128xf16> to vector<16x128xf32>
    %c1 = arith.constant 1 : index
    %c0_7 = arith.constant 0 : index
    %c0_8 = arith.constant 0 : index
    %8 = vector.load %arg3[%c1, %c0_7, %c0_8] : memref<2x8x128xf32, #tpu.memory_space<vmem>>, vector<1x8x128xf32>
    %9 = vector.shape_cast %8 : vector<1x8x128xf32> to vector<8x128xf32>
    %cst_9 = arith.constant dense<0.000000e+00> : vector<16x128xf32>
    %10 = tpu.matmul %2, %9, %cst_9 {dimension_numbers = #tpu.dot_dimension_numbers<[1], [0], [0], [1], [0, 0, 1, 1], [], []>} : vector<16x8xf32>, vector<8x128xf32>, vector<16x128xf32> -> vector<16x128xf32>
    %11 = arith.truncf %10 : vector<16x128xf32> to vector<16x128xf16>
    %12 = arith.extf %11 : vector<16x128xf16> to vector<16x128xf32>
    %13 = arith.mulf %7, %12 : vector<16x128xf32>
    %14 = arith.truncf %13 : vector<16x128xf32> to vector<16x128xf16>
    %15 = arith.extf %14 : vector<16x128xf16> to vector<16x128xf32>
    %16 = math.sqrt %15 : vector<16x128xf32>
    %c0_10 = arith.constant 0 : index
    %c0_11 = arith.constant 0 : index
    %17 = vector.load %arg4[%c0_10, %c0_11] : memref<16x128xf32, #tpu.memory_space<vmem>>, vector<16x128xf32>
    tpu.vector_store %arg4[%c0_10, %c0_11], %16 {strides = array<i32>} : memref<16x128xf32, #tpu.memory_space<vmem>>, vector<16x128xf32>,
    return
  }
  func.func @transform_0(%arg0: i32) -> (i32, i32) {
    %c0_i32 = arith.constant 0 : i32
    %c0_i32_0 = arith.constant 0 : i32
    return %arg0, %c0_i32 : i32, i32
  }
  func.func @transform_1(%arg0: i32) -> (i32, i32) {
    %c0_i32 = arith.constant 0 : i32
    %c0_i32_0 = arith.constant 0 : i32
    %c0_i32_1 = arith.constant 0 : i32
    return %c0_i32, %c0_i32_0 : i32, i32
  }
  func.func @transform_2(%arg0: i32) -> (i32, i32, i32) {
    %c0_i32 = arith.constant 0 : i32
    %c0_i32_0 = arith.constant 0 : i32
    %c0_i32_1 = arith.constant 0 : i32
    %c0_i32_2 = arith.constant 0 : i32
    return %c0_i32, %c0_i32_0, %c0_i32_1 : i32, i32, i32
  }
  func.func @transform_3(%arg0: i32) -> (i32, i32) {
    %c0_i32 = arith.constant 0 : i32
    %c0_i32_0 = arith.constant 0 : i32
    return %arg0, %c0_i32 : i32, i32
  }
}

module attributes {stable_mosaic.version = 11 : i64} {
  func.func @_lora_group_kernel(%arg0: i32, %arg1: memref<16x32xf32, #tpu.memory_space<vmem>>, %arg2: memref<32x8xf32, #tpu.memory_space<vmem>>, %arg3: memref<2x8x128xf32, #tpu.memory_space<vmem>>, %arg4: memref<16x128xf32, #tpu.memory_space<vmem>>) attributes {dimension_semantics = [#tpu.dimension_semantics<parallel>], iteration_bounds = array<i64: 1>, scalar_prefetch = 0 : i64, scratch_operands = 0 : i64, tpu.core_type = #tpu.core_type<tc>, window_params = [{transform_indices = @transform_0, window_bounds = array<i64: 16, 32>}, {pipeline_mode = #tpu.pipeline_mode<synchronous>, transform_indices = @transform_1, window_bounds = array<i64: 32, 8>}, {pipeline_mode = #tpu.pipeline_mode<synchronous>, transform_indices = @transform_2, window_bounds = array<i64: 2, 8, 128>}, {transform_indices = @transform_3, window_bounds = array<i64: 16, 128>}]} {
    %c0 = arith.constant 0 : index
    %c0_0 = arith.constant 0 : index
    %0 = vector.load %arg1[%c0, %c0_0] : memref<16x32xf32, #tpu.memory_space<vmem>>, vector<16x32xf32>
    %c0_1 = arith.constant 0 : index
    %c0_2 = arith.constant 0 : index
    %1 = vector.load %arg2[%c0_1, %c0_2] : memref<32x8xf32, #tpu.memory_space<vmem>>, vector<32x8xf32>
    %cst = arith.constant dense<0.000000e+00> : vector<16x8xf32>
    %2 = tpu.matmul %0, %1, %cst {dimension_numbers = #tpu.dot_dimension_numbers<[1], [0], [0], [1], [0, 0, 1, 1], [], []>} : vector<16x32xf32>, vector<32x8xf32>, vector<16x8xf32> -> vector<16x8xf32>
    %c0_3 = arith.constant 0 : index
    %c0_4 = arith.constant 0 : index
    %c0_5 = arith.constant 0 : index
    %3 = vector.load %arg3[%c0_3, %c0_4, %c0_5] : memref<2x8x128xf32, #tpu.memory_space<vmem>>, vector<1x8x128xf32>
    %4 = vector.shape_cast %3 : vector<1x8x128xf32> to vector<8x128xf32>
    %cst_6 = arith.constant dense<0.000000e+00> : vector<16x128xf32>
    %5 = tpu.matmul %2, %4, %cst_6 {dimension_numbers = #tpu.dot_dimension_numbers<[1], [0], [0], [1], [0, 0, 1, 1], [], []>} : vector<16x8xf32>, vector<8x128xf32>, vector<16x128xf32> -> vector<16x128xf32>
    %c1 = arith.constant 1 : index
    %c0_7 = arith.constant 0 : index
    %c0_8 = arith.constant 0 : index
    %6 = vector.load %arg3[%c1, %c0_7, %c0_8] : memref<2x8x128xf32, #tpu.memory_space<vmem>>, vector<1x8x128xf32>
    %7 = vector.shape_cast %6 : vector<1x8x128xf32> to vector<8x128xf32>
    %cst_9 = arith.constant dense<0.000000e+00> : vector<16x128xf32>
    %8 = tpu.matmul %2, %7, %cst_9 {dimension_numbers = #tpu.dot_dimension_numbers<[1], [0], [0], [1], [0, 0, 1, 1], [], []>} : vector<16x8xf32>, vector<8x128xf32>, vector<16x128xf32> -> vector<16x128xf32>
    %9 = arith.mulf %5, %8 : vector<16x128xf32>
    %10 = tpu.bitcast %9 : vector<16x128xf32> -> vector<16x128xi32>
    %c13_i32 = arith.constant 13 : i32
    %11 = vector.broadcast %c13_i32 : i32 to vector<16x128xi32>
    %12 = arith.shrsi %10, %11 : vector<16x128xi32>
    %c1_i32 = arith.constant 1 : i32
    %13 = vector.broadcast %c1_i32 : i32 to vector<16x128xi32>
    %14 = arith.andi %12, %13 : vector<16x128xi32>
    %c4095_i32 = arith.constant 4095 : i32
    %15 = vector.broadcast %c4095_i32 : i32 to vector<16x128xi32>
    %16 = arith.addi %10, %15 : vector<16x128xi32>
    %17 = arith.addi %16, %14 : vector<16x128xi32>
    %c-8192_i32 = arith.constant -8192 : i32
    %18 = vector.broadcast %c-8192_i32 : i32 to vector<16x128xi32>
    %19 = arith.andi %17, %18 : vector<16x128xi32>
    %20 = tpu.bitcast %19 : vector<16x128xi32> -> vector<16x128xf32>
    %21 = math.absf %20 : vector<16x128xf32>
    %cst_10 = arith.constant 6.550400e+04 : f32
    %22 = vector.broadcast %cst_10 : f32 to vector<16x128xf32>
    %23 = arith.cmpf ogt, %21, %22 : vector<16x128xf32>
    %cst_11 = arith.constant 0.000000e+00 : f32
    %24 = vector.broadcast %cst_11 : f32 to vector<16x128xf32>
    %25 = arith.cmpf ogt, %20, %24 : vector<16x128xf32>
    %cst_12 = arith.constant 0.000000e+00 : f32
    %cst_13 = arith.constant 0x7F800000 : f32
    %26 = arith.subf %cst_12, %cst_13 : f32
    %cst_14 = arith.constant 0x7F800000 : f32
    %27 = vector.broadcast %cst_14 : f32 to vector<16x128xf32>
    %28 = vector.broadcast %26 : f32 to vector<16x128xf32>
    %29 = arith.select %25, %27, %28 : vector<16x128xi1>, vector<16x128xf32>
    %30 = arith.select %23, %29, %20 : vector<16x128xi1>, vector<16x128xf32>
    %cst_15 = arith.constant 0x4B800000 : f32
    %31 = vector.broadcast %cst_15 : f32 to vector<16x128xf32>
    %32 = arith.mulf %9, %31 : vector<16x128xf32>
    %cst_16 = arith.constant 0x4B400000 : f32
    %33 = vector.broadcast %cst_16 : f32 to vector<16x128xf32>
    %34 = arith.addf %32, %33 : vector<16x128xf32>
    %cst_17 = arith.constant 0x4B400000 : f32
    %35 = vector.broadcast %cst_17 : f32 to vector<16x128xf32>
    %36 = arith.subf %34, %35 : vector<16x128xf32>
    %cst_18 = arith.constant 5.96046448E-8 : f32
    %37 = vector.broadcast %cst_18 : f32 to vector<16x128xf32>
    %38 = arith.mulf %36, %37 : vector<16x128xf32>
    %39 = math.absf %9 : vector<16x128xf32>
    %cst_19 = arith.constant 6.10351563E-5 : f32
    %40 = vector.broadcast %cst_19 : f32 to vector<16x128xf32>
    %41 = arith.cmpf olt, %39, %40 : vector<16x128xf32>
    %42 = arith.select %41, %38, %30 : vector<16x128xi1>, vector<16x128xf32>
    %43 = math.sqrt %42 : vector<16x128xf32>
    %c0_20 = arith.constant 0 : index
    %c0_21 = arith.constant 0 : index
    %44 = vector.load %arg4[%c0_20, %c0_21] : memref<16x128xf32, #tpu.memory_space<vmem>>, vector<16x128xf32>
    tpu.vector_store %arg4[%c0_20, %c0_21], %43 {strides = array<i32>} : memref<16x128xf32, #tpu.memory_space<vmem>>, vector<16x128xf32>,
    return
  }
  func.func @transform_0(%arg0: i32) -> (i32, i32) {
    %c0_i32 = arith.constant 0 : i32
    %c0_i32_0 = arith.constant 0 : i32
    return %arg0, %c0_i32 : i32, i32
  }
  func.func @transform_1(%arg0: i32) -> (i32, i32) {
    %c0_i32 = arith.constant 0 : i32
    %c0_i32_0 = arith.constant 0 : i32
    %c0_i32_1 = arith.constant 0 : i32
    return %c0_i32, %c0_i32_0 : i32, i32
  }
  func.func @transform_2(%arg0: i32) -> (i32, i32, i32) {
    %c0_i32 = arith.constant 0 : i32
    %c0_i32_0 = arith.constant 0 : i32
    %c0_i32_1 = arith.constant 0 : i32
    %c0_i32_2 = arith.constant 0 : i32
    return %c0_i32, %c0_i32_0, %c0_i32_1 : i32, i32, i32
  }
  func.func @transform_3(%arg0: i32) -> (i32, i32) {
    %c0_i32 = arith.constant 0 : i32
    %c0_i32_0 = arith.constant 0 : i32
    return %arg0, %c0_i32 : i32, i32
  }
}

</mosaic_0001>

<llo_original>
// kernel: tpu_custom_call.1
$region0: #{tpu_custom_call.1}
  #allocation0 [shape = 'u32[]', space=smem, size = 0x4, offset = 0x4, fixed_abs, tag = 'smem constant byte address 0x4 - core index']
  #allocation1 [shape = 'u32[144,128]{1,0:T(1,128)}', space=vmem, size = 0x12000, scoped, tag = 'internal scratch']
  %s0 = inlined_call_operand.vmem [shape: f32[16,32], index: 0, kind: input, shape index: {}]
  %s1 = inlined_call_operand.vmem [shape: f32[32,8], index: 1, kind: input, shape index: {}]
  %s2 = inlined_call_operand.vmem [shape: f32[2,8,128], index: 2, kind: input, shape index: {}]
  %s3 = inlined_call_operand.hbm [shape: f32[16,128], index: 3, kind: output, shape index: {}]
  %s4 = sld [smem:[#allocation0]]
  $region22: #{tpu_custom_call.1} parent=0
    _
  %s6 = ssub.s32 1, %s4
  %s7 = scalar_select 0, %s6, %s4
  $region1: #{tpu_custom_call.1} parent=0
    #allocation2 [shape = 'u8[8192]{0}', space=vmem, size = 0x2000, scoped, tag = 'output window, operand 0, single buffered']
    #allocation3 [shape = 's32[1]{0}', space=sflag, size = 0x4, scoped, tag = 'scoped memory for tpu_custom_call.1']
    %8 = vsyncpa [#allocation3], 0
    // Predicated region
    $region2: #{tpu_custom_call.1} parent=1 // pred_check
      _
    $region3: #{tpu_custom_call.1} parent=1 // pred_check_branch
      %10 = sbr.rel (0) target = $region5
    $region4: #{tpu_custom_call.1} parent=1 // pred_region
      _
    $region5: #{tpu_custom_call.1} parent=1 // pred_fallthru
      _
    // Predicated region
    $region6: #{tpu_custom_call.1} parent=1 // pred_check
      _
    $region7: #{tpu_custom_call.1} parent=1 // pred_check_branch
      %12 = sbr.rel (0) target = $region9
    $region8: #{tpu_custom_call.1} parent=1 // pred_region
      _
    $region9: #{tpu_custom_call.1} parent=1 // pred_fallthru
      _
    // Predicated region
    $region10: #{tpu_custom_call.1} parent=1 // pred_check
      _
    $region11: #{tpu_custom_call.1} parent=1 // pred_check_branch
      %14 = sbr.rel (0) target = $region13
    $region12: #{tpu_custom_call.1} parent=1 // pred_region
      _
    $region13: #{tpu_custom_call.1} parent=1 // pred_fallthru
      _
    %v15 = vld [vmem:[%s0] sm:$0xff]
    %v16 = vld [vmem:[%s0 + $0x8] sm:$0xff]
    %v17 = vld [vmem:[%s1] sm:$0xff]
    %v18 = vld [vmem:[%s1 + $0x8] sm:$0xff]
    %v19 = vld [vmem:[%s1 + $0x10] sm:$0xff]
    %v20 = vld [vmem:[%s1 + $0x18] sm:$0xff]
    %vm21 = vcmask 261120
    %v23 = vsel %vm21, %v15, 0
    %v26 = vsel %vm21, %v16, 0
    %28 = vmatprep.subr.mxu0 0.0
    %29 = vmatpush1.msra.mxu0 0.0
    %30 = vmatprep.subr.mxu0 0.0
    %31 = vmatpush1.msra.mxu0 0.0
    %32 = vmatprep.subr.mxu0 0.0
    %33 = vmatpush1.msra.mxu0 0.0
    %34 = vmatprep.subr.mxu0 0.0
    %35 = vmatpush1.msra.mxu0 0.0
    %36 = vmatprep.subr.mxu0 0.0
    %37 = vmatpush1.msra.mxu0 0.0
    %38 = vmatprep.subr.mxu0 0.0
    %39 = vmatpush1.msra.mxu0 0.0
    %40 = vmatprep.subr.mxu0 0.0
    %41 = vmatpush1.msra.mxu0 0.0
    %42 = vmatprep.subr.mxu0 0.0
    %43 = vmatpush1.msra.mxu0 0.0
    %44 = vmatprep.subr.mxu0 0.0
    %45 = vmatpush1.msra.mxu0 0.0
    %46 = vmatprep.subr.mxu0 0.0
    %47 = vmatpush1.msra.mxu0 0.0
    %48 = vmatprep.subr.mxu0 0.0
    %49 = vmatpush1.msra.mxu0 0.0
    %50 = vmatprep.subr.mxu0 0.0
    %51 = vmatpush1.msra.mxu0 0.0
    %52 = vmatprep.subr.mxu0 0.0
    %53 = vmatpush1.msra.mxu0 %v20
    %54 = vmatprep.subr.mxu0 0.0
    %55 = vmatpush1.msra.mxu0 %v19
    %56 = vmatprep.subr.mxu0 0.0
    %57 = vmatpush1.msra.mxu0 %v18
    %58 = vmatprep.subr.mxu0 0.0
    %59 = vmatpush1.msra.mxu0 %v17
    %60 = vmatprep.subr.mxu0 0.0
    %61 = vmatpush2.msra.mxu0 0.0
    %62 = vmatprep.subr.mxu0 0.0
    %63 = vmatpush2.msra.mxu0 0.0
    %64 = vmatprep.subr.mxu0 0.0
    %65 = vmatpush2.msra.mxu0 0.0
    %66 = vmatprep.subr.mxu0 0.0
    %67 = vmatpush2.msra.mxu0 0.0
    %68 = vmatprep.subr.mxu0 0.0
    %69 = vmatpush2.msra.mxu0 0.0
    %70 = vmatprep.subr.mxu0 0.0
    %71 = vmatpush2.msra.mxu0 0.0
    %72 = vmatprep.subr.mxu0 0.0
    %73 = vmatpush2.msra.mxu0 0.0
    %74 = vmatprep.subr.mxu0 0.0
    %75 = vmatpush2.msra.mxu0 0.0
    %76 = vmatprep.subr.mxu0 0.0
    %77 = vmatpush2.msra.mxu0 0.0
    %78 = vmatprep.subr.mxu0 0.0
    %79 = vmatpush2.msra.mxu0 0.0
    %80 = vmatprep.subr.mxu0 0.0
    %81 = vmatpush2.msra.mxu0 0.0
    %82 = vmatprep.subr.mxu0 0.0
    %83 = vmatpush2.msra.mxu0 0.0
    %84 = vmatprep.subr.mxu0 0.0
    %85 = vmatpush2.msra.mxu0 0.0
    %86 = vmatprep.subr.mxu0 0.0
    %87 = vmatpush2.msra.mxu0 0.0
    %88 = vmatprep.subr.mxu0 0.0
    %89 = vmatpush2.msra.mxu0 0.0
    %90 = vmatprep.subr.mxu0 0.0
    %91 = vmatpush2.msra.mxu0 0.0
    %92 = vmatprep.mubr.f32.mxu0 0.0
    %93 = vmatmul.mubr.f32.gmra.mxu0 %v23
    %v94 = vpop.f32.mrf.mxu0
    %v95 = vadd.f32 0.0, %v94
    %v96 = vpop.f32.mrf.mxu0
    %97 = vmatprep.mubr.f32.mxu0 0.0
    %98 = vmatmul.mubr.f32.gmra.mxu0 %v26
    %v99 = vpop.f32.mrf.mxu0
    %v100 = vadd.f32 0.0, %v99
    %v101 = vpop.f32.mrf.mxu0
    %102 = vdwg.mxu0
    %v103 = vld [vmem:[%s2] sm:$0xff]
    %vm104 = vcmask 64512
    %v106 = vsel %vm104, %v95, 0
    %v109 = vsel %vm104, %v100, 0
    %111 = vmatprep.subr.mxu0 0.0
    %112 = vmatpush1.msra.mxu0 0.0
    %113 = vmatprep.subr.mxu0 0.0
    %114 = vmatpush1.msra.mxu0 0.0
    %115 = vmatprep.subr.mxu0 0.0
    %116 = vmatpush1.msra.mxu0 0.0
    %117 = vmatprep.subr.mxu0 0.0
    %118 = vmatpush1.msra.mxu0 0.0
    %119 = vmatprep.subr.mxu0 0.0
    %120 = vmatpush1.msra.mxu0 0.0
    %121 = vmatprep.subr.mxu0 0.0
    %122 = vmatpush1.msra.mxu0 0.0
    %123 = vmatprep.subr.mxu0 0.0
    %124 = vmatpush1.msra.mxu0 0.0
    %125 = vmatprep.subr.mxu0 0.0
    %126 = vmatpush1.msra.mxu0 0.0
    %127 = vmatprep.subr.mxu0 0.0
    %128 = vmatpush1.msra.mxu0 0.0
    %129 = vmatprep.subr.mxu0 0.0
    %130 = vmatpush1.msra.mxu0 0.0
    %131 = vmatprep.subr.mxu0 0.0
    %132 = vmatpush1.msra.mxu0 0.0
    %133 = vmatprep.subr.mxu0 0.0
    %134 = vmatpush1.msra.mxu0 0.0
    %135 = vmatprep.subr.mxu0 0.0
    %136 = vmatpush1.msra.mxu0 0.0
    %137 = vmatprep.subr.mxu0 0.0
    %138 = vmatpush1.msra.mxu0 0.0
    %139 = vmatprep.subr.mxu0 0.0
    %140 = vmatpush1.msra.mxu0 0.0
    %141 = vmatprep.subr.mxu0 0.0
    %142 = vmatpush1.msra.mxu0 %v103
    %143 = vmatprep.subr.mxu0 0.0
    %144 = vmatpush2.msra.mxu0 0.0
    %145 = vmatprep.subr.mxu0 0.0
    %146 = vmatpush2.msra.mxu0 0.0
    %147 = vmatprep.subr.mxu0 0.0
    %148 = vmatpush2.msra.mxu0 0.0
    %149 = vmatprep.subr.mxu0 0.0
    %150 = vmatpush2.msra.mxu0 0.0
    %151 = vmatprep.subr.mxu0 0.0
    %152 = vmatpush2.msra.mxu0 0.0
    %153 = vmatprep.subr.mxu0 0.0
    %154 = vmatpush2.msra.mxu0 0.0
    %155 = vmatprep.subr.mxu0 0.0
    %156 = vmatpush2.msra.mxu0 0.0
    %157 = vmatprep.subr.mxu0 0.0
    %158 = vmatpush2.msra.mxu0 0.0
    %159 = vmatprep.subr.mxu0 0.0
    %160 = vmatpush2.msra.mxu0 0.0
    %161 = vmatprep.subr.mxu0 0.0
    %162 = vmatpush2.msra.mxu0 0.0
    %163 = vmatprep.subr.mxu0 0.0
    %164 = vmatpush2.msra.mxu0 0.0
    %165 = vmatprep.subr.mxu0 0.0
    %166 = vmatpush2.msra.mxu0 0.0
    %167 = vmatprep.subr.mxu0 0.0
    %168 = vmatpush2.msra.mxu0 0.0
    %169 = vmatprep.subr.mxu0 0.0
    %170 = vmatpush2.msra.mxu0 0.0
    %171 = vmatprep.subr.mxu0 0.0
    %172 = vmatpush2.msra.mxu0 0.0
    %173 = vmatprep.subr.mxu0 0.0
    %174 = vmatpush2.msra.mxu0 0.0
    %175 = vmatprep.mubr.f32.mxu0 0.0
    %176 = vmatmul.mubr.f32.gmra.mxu0 %v106
    %v177 = vpop.f32.mrf.mxu0
    %v178 = vadd.f32 0.0, %v177
    %v179 = vpop.f32.mrf.mxu0
    %180 = vmatprep.mubr.f32.mxu0 0.0
    %181 = vmatmul.mubr.f32.gmra.mxu0 %v109
    %v182 = vpop.f32.mrf.mxu0
    %v183 = vadd.f32 0.0, %v182
    %v184 = vpop.f32.mrf.mxu0
    %185 = vdwg.mxu0
    %s186 = scalar_lea.vmem %s2, 8
    %v187 = vld [vmem:[%s186] sm:$0xff]
    %188 = vmatprep.subr.mxu0 0.0
    %189 = vmatpush1.msra.mxu0 0.0
    %190 = vmatprep.subr.mxu0 0.0
    %191 = vmatpush1.msra.mxu0 0.0
    %192 = vmatprep.subr.mxu0 0.0
    %193 = vmatpush1.msra.mxu0 0.0
    %194 = vmatprep.subr.mxu0 0.0
    %195 = vmatpush1.msra.mxu0 0.0
    %196 = vmatprep.subr.mxu0 0.0
    %197 = vmatpush1.msra.mxu0 0.0
    %198 = vmatprep.subr.mxu0 0.0
    %199 = vmatpush1.msra.mxu0 0.0
    %200 = vmatprep.subr.mxu0 0.0
    %201 = vmatpush1.msra.mxu0 0.0
    %202 = vmatprep.subr.mxu0 0.0
    %203 = vmatpush1.msra.mxu0 0.0
    %204 = vmatprep.subr.mxu0 0.0
    %205 = vmatpush1.msra.mxu0 0.0
    %206 = vmatprep.subr.mxu0 0.0
    %207 = vmatpush1.msra.mxu0 0.0
    %208 = vmatprep.subr.mxu0 0.0
    %209 = vmatpush1.msra.mxu0 0.0
    %210 = vmatprep.subr.mxu0 0.0
    %211 = vmatpush1.msra.mxu0 0.0
    %212 = vmatprep.subr.mxu0 0.0
    %213 = vmatpush1.msra.mxu0 0.0
    %214 = vmatprep.subr.mxu0 0.0
    %215 = vmatpush1.msra.mxu0 0.0
    %216 = vmatprep.subr.mxu0 0.0
    %217 = vmatpush1.msra.mxu0 0.0
    %218 = vmatprep.subr.mxu0 0.0
    %219 = vmatpush1.msra.mxu0 %v187
    %220 = vmatprep.subr.mxu0 0.0
    %221 = vmatpush2.msra.mxu0 0.0
    %222 = vmatprep.subr.mxu0 0.0
    %223 = vmatpush2.msra.mxu0 0.0
    %224 = vmatprep.subr.mxu0 0.0
    %225 = vmatpush2.msra.mxu0 0.0
    %226 = vmatprep.subr.mxu0 0.0
    %227 = vmatpush2.msra.mxu0 0.0
    %228 = vmatprep.subr.mxu0 0.0
    %229 = vmatpush2.msra.mxu0 0.0
    %230 = vmatprep.subr.mxu0 0.0
    %231 = vmatpush2.msra.mxu0 0.0
    %232 = vmatprep.subr.mxu0 0.0
    %233 = vmatpush2.msra.mxu0 0.0
    %234 = vmatprep.subr.mxu0 0.0
    %235 = vmatpush2.msra.mxu0 0.0
    %236 = vmatprep.subr.mxu0 0.0
    %237 = vmatpush2.msra.mxu0 0.0
    %238 = vmatprep.subr.mxu0 0.0
    %239 = vmatpush2.msra.mxu0 0.0
    %240 = vmatprep.subr.mxu0 0.0
    %241 = vmatpush2.msra.mxu0 0.0
    %242 = vmatprep.subr.mxu0 0.0
    %243 = vmatpush2.msra.mxu0 0.0
    %244 = vmatprep.subr.mxu0 0.0
    %245 = vmatpush2.msra.mxu0 0.0
    %246 = vmatprep.subr.mxu0 0.0
    %247 = vmatpush2.msra.mxu0 0.0
    %248 = vmatprep.subr.mxu0 0.0
    %249 = vmatpush2.msra.mxu0 0.0
    %250 = vmatprep.subr.mxu0 0.0
    %251 = vmatpush2.msra.mxu0 0.0
    %252 = vmatprep.mubr.f32.mxu0 0.0
    %253 = vmatmul.mubr.f32.gmra.mxu0 %v106
    %v254 = vpop.f32.mrf.mxu0
    %v255 = vadd.f32 0.0, %v254
    %v256 = vpop.f32.mrf.mxu0
    %257 = vmatprep.mubr.f32.mxu0 0.0
    %258 = vmatmul.mubr.f32.gmra.mxu0 %v109
    %v259 = vpop.f32.mrf.mxu0
    %v260 = vadd.f32 0.0, %v259
    %v261 = vpop.f32.mrf.mxu0
    %262 = vdwg.mxu0
    %v263 = vmul.f32 %v178, %v255
    %v264 = vmul.f32 %v183, %v260
    %v267 = vshra.s32 %v263, 13
    %v268 = vshra.s32 %v264, 13
    %v269 = vand.u32 %v267, 1
    %v270 = vand.u32 %v268, 1
    %v271 = vadd.s32 %v263, 4095
    %v272 = vadd.s32 %v264, 4095
    %v273 = vadd.s32 %v271, %v269
    %v274 = vadd.s32 %v272, %v270
    %v275 = vand.u32 %v273, 4294959104
    %v276 = vand.u32 %v274, 4294959104
    %v279 = vand.u32 2147483647, %v275
    %v280 = vand.u32 2147483647, %v276
    %vm281 = vcmp.gt.f32.partialorder %v279, 65504.0
    %vm282 = vcmp.gt.f32.partialorder %v280, 65504.0
    %vm283 = vcmp.gt.f32.partialorder %v275, 0.0
    %vm284 = vcmp.gt.f32.partialorder %v276, 0.0
    %v285 = vsel %vm283, inf, -inf
    %v286 = vsel %vm284, inf, -inf
    %v287 = vsel %vm281, %v285, %v275
    %v288 = vsel %vm282, %v286, %v276
    %v289 = vmul.f32 %v263, 16777216.0
    %v290 = vmul.f32 %v264, 16777216.0
    %v291 = vadd.f32 %v289, 12582912.0
    %v292 = vadd.f32 %v290, 12582912.0
    %v293 = vsub.f32 %v291, 12582912.0
    %v294 = vsub.f32 %v292, 12582912.0
    %v295 = vmul.f32 %v293, 5.9604645e-08
    %v296 = vmul.f32 %v294, 5.9604645e-08
    %v297 = vand.u32 2147483647, %v263
    %v298 = vand.u32 2147483647, %v264
    %vm299 = vcmp.lt.f32.partialorder %v297, 6.1035156e-05
    %vm300 = vcmp.lt.f32.partialorder %v298, 6.1035156e-05
    %v301 = vsel %vm299, %v295, %v287
    %v302 = vsel %vm300, %v296, %v288
    %v303 = vrsqrt.pop %v301
    %v304 = vmul.f32 %v301, %v303
    %vm305 = vcmp.eq.f32.partialorder %v301, inf
    %v306 = vsel %vm305, %v301, %v304
    %vm307 = vcmp.eq.f32.partialorder %v301, 0.0
    %v308 = vand.u32 %v301, 2147483648
    %v309 = vsel %vm307, %v308, %v306
    %v310 = vrsqrt.pop %v302
    %v311 = vmul.f32 %v302, %v310
    %vm312 = vcmp.eq.f32.partialorder %v302, inf
    %v313 = vsel %vm312, %v302, %v311
    %vm314 = vcmp.eq.f32.partialorder %v302, 0.0
    %v315 = vand.u32 %v302, 2147483648
    %v316 = vsel %vm314, %v315, %v313
    %317 = vst [vmem:[#allocation2] sm:$0xff] %v309
    %318 = vst [vmem:[#allocation2 + $0x8] sm:$0xff] %v316
    // Predicated region
    $region14: #{tpu_custom_call.1} parent=1 // pred_check
      _
    $region15: #{tpu_custom_call.1} parent=1 // pred_check_branch
      %320 = sbr.rel (0) target = $region17
    $region16: #{tpu_custom_call.1} parent=1 // pred_region
      %s322 = ssub.s32 256, 256
      %323 = vsyncadd [#allocation3], %s322
      %s324 = sshll.u32 [#allocation2], 4
      %s325 = int_to_ptr.vmem [resolvable:$true] %s324
      %330 = dma.vmem_to_hbm [thread:$0]  %s325, 256, %s3, [#allocation3], 128, 128, 8
    $region17: #{tpu_custom_call.1} parent=1 // pred_fallthru
      _
    // Predicated region
    $region18: #{tpu_custom_call.1} parent=1 // pred_check
      _
    $region19: #{tpu_custom_call.1} parent=1 // pred_check_branch
      %332 = sbr.rel (0) target = $region21
    $region20: #{tpu_custom_call.1} parent=1 // pred_region
      %333 = dma.done [#allocation3], 256
    $region21: #{tpu_custom_call.1} parent=1 // pred_fallthru
      _
    %334 = vsyncpa [#allocation3], 1

</llo_original>
